<compile_context>
chip_gen: v7x
topology: tpu7x:2x2x1
jax: 0.10.0
libtpu: 0.0.40
codegen_flags: <defaults>
</compile_context>

<pallas_src>
import jax
import jax.numpy as jnp
from jax.experimental import pallas as pl
from jax.experimental.pallas import tpu as pltpu

_LANE = 128      # lane width / MXU-friendly padding target for the hidden dim
_SUBLANE = 8     # sublane granularity for the batch tile


def _round_up(x: int, m: int) -> int:
    return ((x + m - 1) // m) * m


def _pick_tile(batch: int, tile_b: int, min_steps: int = 2) -> int:
    """Pick a batch tile: as large as tile_b, but prefer >= min_steps grid
    steps (v7x has two TensorCores) while keeping tiles >= 128 rows so the
    ~0.35us per-step overhead stays amortized."""
    eff = min(tile_b, _round_up(batch, _SUBLANE))
    eff = _round_up(eff, _SUBLANE)
    while pl.cdiv(batch, eff) < min_steps and eff > 128:
        eff = _round_up(eff // 2, _SUBLANE)
    return eff


def actor_kernel(s_ref, w1_ref, b1_ref, w2_ref, b2_ref, a_ref):
    # fc1: Linear(state_dim -> hidden) + Tanh.  bf16 operands on the MXU,
    # f32 accumulation; bias add + tanh in f32 on the VPU/EUP.
    x = s_ref[...].astype(jnp.bfloat16)
    h = jnp.tanh(
        jnp.dot(x, w1_ref[...], preferred_element_type=jnp.float32)
        + b1_ref[...]
    )
    # fc2: Linear(hidden -> action_dim) + Tanh
    a_ref[...] = jnp.tanh(
        jnp.dot(h.astype(jnp.bfloat16), w2_ref[...],
                preferred_element_type=jnp.float32)
        + b2_ref[...]
    )


def prepare_actor_params(w1, b1, w2, b2):
    """One-time prep (do NOT call per forward): pad hidden dim to 128 lanes,
    cast matmul weights to bf16, biases to f32 row vectors."""
    H = w1.shape[1]
    H_pad = _round_up(H, _LANE)
    w1_p = jnp.pad(jnp.asarray(w1, jnp.float32),
                   ((0, 0), (0, H_pad - H))).astype(jnp.bfloat16)
    b1_p = jnp.pad(jnp.asarray(b1, jnp.float32).reshape(1, -1),
                   ((0, 0), (0, H_pad - H)))
    w2_p = jnp.pad(jnp.asarray(w2, jnp.float32),
                   ((0, H_pad - H), (0, 0))).astype(jnp.bfloat16)
    b2_p = jnp.asarray(b2, jnp.float32).reshape(1, -1)
    return w1_p, b1_p, w2_p, b2_p


def actor_forward(s, prepared_params, *, tile_b: int = 512):
    """s: [B, state_dim]; prepared_params from prepare_actor_params().
    Returns a: [B, action_dim] (f32)."""
    w1_p, b1_p, w2_p, b2_p = prepared_params
    B, S = s.shape
    H_pad = w1_p.shape[1]
    A = w2_p.shape[1]

    eff_tile = _pick_tile(B, tile_b)
    grid = (pl.cdiv(B, eff_tile),)   # partial last block masked by Pallas

    return pl.pallas_call(
        actor_kernel,
        out_shape=jax.ShapeDtypeStruct((B, A), jnp.float32),
        grid=grid,
        in_specs=[
            # activation tile streams over the batch grid axis
            pl.BlockSpec((eff_tile, S), lambda i: (i, 0)),
            # weights / biases stay VMEM-resident across all grid steps
            pl.BlockSpec((S, H_pad), lambda i: (0, 0)),
            pl.BlockSpec((1, H_pad), lambda i: (0, 0)),
            pl.BlockSpec((H_pad, A), lambda i: (0, 0)),
            pl.BlockSpec((1, A), lambda i: (0, 0)),
        ],
        # natural (unpadded) action width: 32x fewer HBM output bytes than
        # padding A->128, and no external column slice.
        out_specs=pl.BlockSpec((eff_tile, A), lambda i: (i, 0)),
        compiler_params=pltpu.CompilerParams(
            dimension_semantics=("parallel",),   # lets v7x use both TCs
        ),
    )(s, w1_p, b1_p, w2_p, b2_p)


def init_actor_params(key, state_dim, action_dim, hidden=100):
    # Deterministic init mimicking nn.Linear's U(-1/sqrt(fan_in), 1/sqrt(fan_in)).
    k1, k2, k3, k4 = jax.random.split(key, 4)
    lim1 = 1.0 / jnp.sqrt(jnp.float32(state_dim))
    lim2 = 1.0 / jnp.sqrt(jnp.float32(hidden))
    w1 = jax.random.uniform(k1, (state_dim, hidden), jnp.float32, -lim1, lim1)
    b1 = jax.random.uniform(k2, (1, hidden), jnp.float32, -lim1, lim1)
    w2 = jax.random.uniform(k3, (hidden, action_dim), jnp.float32, -lim2, lim2)
    b2 = jax.random.uniform(k4, (1, action_dim), jnp.float32, -lim2, lim2)
    return w1, b1, w2, b2


if __name__ == "__main__":
    key = jax.random.PRNGKey(0)
    # Batch large enough to exercise >=2 grid steps (tile picker gives 128x2)
    # while staying a small, fast test.
    batch, state_dim, action_dim = 256, 16, 4

    k_s, k_p = jax.random.split(key)
    s = jax.random.normal(k_s, (batch, state_dim), jnp.float32)
    w1, b1, w2, b2 = init_actor_params(k_p, state_dim, action_dim)

    # One-time param prep (hoisted out of the per-call path).
    prepped = prepare_actor_params(w1, b1, w2, b2)

    a = actor_forward(s, prepped)
    jax.block_until_ready(a)

    # Reference check in plain JAX f32 (same math as the PyTorch module).
    # bf16 matmul operands loosen the tolerance slightly.
    ref = jnp.tanh(jnp.tanh(s @ w1 + b1) @ w2 + b2)
    assert a.shape == (batch, action_dim)
    assert jnp.allclose(a, ref, atol=3e-2), "mismatch vs reference"

    # Odd, small batch (exercises the partial-block / masked-writeback path).
    a_small = actor_forward(s[:7], prepped)
    jax.block_until_ready(a_small)
    assert a_small.shape == (7, action_dim)
    assert jnp.allclose(a_small, ref[:7], atol=3e-2), "mismatch (small batch)"

    print("KERNEL_OK")
</pallas_src>

<mosaic_0001>
module attributes {stable_mosaic.version = 11 : i64} {
  func.func @actor_kernel(%arg0: i32, %arg1: memref<128x16xf32, #tpu.memory_space<vmem>>, %arg2: memref<16x128xbf16, #tpu.memory_space<vmem>>, %arg3: memref<1x128xf32, #tpu.memory_space<vmem>>, %arg4: memref<128x4xbf16, #tpu.memory_space<vmem>>, %arg5: memref<1x4xf32, #tpu.memory_space<vmem>>, %arg6: memref<128x4xf32, #tpu.memory_space<vmem>>) attributes {dimension_semantics = [#tpu.dimension_semantics<parallel>], iteration_bounds = array<i64: 2>, scalar_prefetch = 0 : i64, scratch_operands = 0 : i64, tpu.core_type = #tpu.core_type<tc>, window_params = [{transform_indices = @transform_0, window_bounds = array<i64: 128, 16>}, {pipeline_mode = #tpu.pipeline_mode<synchronous>, transform_indices = @transform_1, window_bounds = array<i64: 16, 128>}, {pipeline_mode = #tpu.pipeline_mode<synchronous>, transform_indices = @transform_2, window_bounds = array<i64: 1, 128>}, {pipeline_mode = #tpu.pipeline_mode<synchronous>, transform_indices = @transform_3, window_bounds = array<i64: 128, 4>}, {pipeline_mode = #tpu.pipeline_mode<synchronous>, transform_indices = @transform_4, window_bounds = array<i64: 1, 4>}, {transform_indices = @transform_5, window_bounds = array<i64: 128, 4>}]} {
    %c0 = arith.constant 0 : index
    %c0_0 = arith.constant 0 : index
    %0 = vector.load %arg1[%c0, %c0_0] : memref<128x16xf32, #tpu.memory_space<vmem>>, vector<128x16xf32>
    %1 = arith.truncf %0 : vector<128x16xf32> to vector<128x16xbf16>
    %c0_1 = arith.constant 0 : index
    %c0_2 = arith.constant 0 : index
    %2 = vector.load %arg2[%c0_1, %c0_2] : memref<16x128xbf16, #tpu.memory_space<vmem>>, vector<16x128xbf16>
    %cst = arith.constant dense<0.000000e+00> : vector<128x128xf32>
    %3 = tpu.matmul %1, %2, %cst {dimension_numbers = #tpu.dot_dimension_numbers<[1], [0], [0], [1], [0, 0, 1, 1], [], []>} : vector<128x16xbf16>, vector<16x128xbf16>, vector<128x128xf32> -> vector<128x128xf32>
    %c0_3 = arith.constant 0 : index
    %c0_4 = arith.constant 0 : index
    %4 = vector.load %arg3[%c0_3, %c0_4] : memref<1x128xf32, #tpu.memory_space<vmem>>, vector<1x128xf32>
    %5 = vector.broadcast %4 : vector<1x128xf32> to vector<128x128xf32>
    %6 = arith.addf %3, %5 : vector<128x128xf32>
    %7 = math.tanh %6 : vector<128x128xf32>
    %8 = arith.truncf %7 : vector<128x128xf32> to vector<128x128xbf16>
    %c0_5 = arith.constant 0 : index
    %c0_6 = arith.constant 0 : index
    %9 = vector.load %arg4[%c0_5, %c0_6] : memref<128x4xbf16, #tpu.memory_space<vmem>>, vector<128x4xbf16>
    %cst_7 = arith.constant dense<0.000000e+00> : vector<128x4xf32>
    %10 = tpu.matmul %8, %9, %cst_7 {dimension_numbers = #tpu.dot_dimension_numbers<[1], [0], [0], [1], [0, 0, 1, 1], [], []>} : vector<128x128xbf16>, vector<128x4xbf16>, vector<128x4xf32> -> vector<128x4xf32>
    %c0_8 = arith.constant 0 : index
    %c0_9 = arith.constant 0 : index
    %11 = vector.load %arg5[%c0_8, %c0_9] : memref<1x4xf32, #tpu.memory_space<vmem>>, vector<1x4xf32>
    %12 = vector.broadcast %11 : vector<1x4xf32> to vector<128x4xf32>
    %13 = arith.addf %10, %12 : vector<128x4xf32>
    %14 = math.tanh %13 : vector<128x4xf32>
    %c0_10 = arith.constant 0 : index
    %c0_11 = arith.constant 0 : index
    %15 = vector.load %arg6[%c0_10, %c0_11] : memref<128x4xf32, #tpu.memory_space<vmem>>, vector<128x4xf32>
    tpu.vector_store %arg6[%c0_10, %c0_11], %14 {strides = array<i32>} : memref<128x4xf32, #tpu.memory_space<vmem>>, vector<128x4xf32>,
    return
  }
  func.func @transform_0(%arg0: i32) -> (i32, i32) {
    %c0_i32 = arith.constant 0 : i32
    %c0_i32_0 = arith.constant 0 : i32
    return %arg0, %c0_i32 : i32, i32
  }
  func.func @transform_1(%arg0: i32) -> (i32, i32) {
    %c0_i32 = arith.constant 0 : i32
    %c0_i32_0 = arith.constant 0 : i32
    %c0_i32_1 = arith.constant 0 : i32
    return %c0_i32, %c0_i32_0 : i32, i32
  }
  func.func @transform_2(%arg0: i32) -> (i32, i32) {
    %c0_i32 = arith.constant 0 : i32
    %c0_i32_0 = arith.constant 0 : i32
    %c0_i32_1 = arith.constant 0 : i32
    return %c0_i32, %c0_i32_0 : i32, i32
  }
  func.func @transform_3(%arg0: i32) -> (i32, i32) {
    %c0_i32 = arith.constant 0 : i32
    %c0_i32_0 = arith.constant 0 : i32
    %c0_i32_1 = arith.constant 0 : i32
    return %c0_i32, %c0_i32_0 : i32, i32
  }
  func.func @transform_4(%arg0: i32) -> (i32, i32) {
    %c0_i32 = arith.constant 0 : i32
    %c0_i32_0 = arith.constant 0 : i32
    %c0_i32_1 = arith.constant 0 : i32
    return %c0_i32, %c0_i32_0 : i32, i32
  }
  func.func @transform_5(%arg0: i32) -> (i32, i32) {
    %c0_i32 = arith.constant 0 : i32
    %c0_i32_0 = arith.constant 0 : i32
    return %arg0, %c0_i32 : i32, i32
  }
}

</mosaic_0001>

<llo_original>
// kernel: tpu_custom_call.1
$region0: #{tpu_custom_call.1}
  #allocation0 [shape = 'u32[]', space=smem, size = 0x4, offset = 0x4, fixed_abs, tag = 'smem constant byte address 0x4 - core index']
  #allocation1 [shape = 'u32[144,128]{1,0:T(1,128)}', space=vmem, size = 0x12000, scoped, tag = 'internal scratch']
  %s0 = inlined_call_operand.vmem [shape: f32[256,16], index: 0, kind: input, shape index: {}]
  %s1 = inlined_call_operand.vmem [shape: bf16[16,128], index: 1, kind: input, shape index: {}]
  %s2 = inlined_call_operand.vmem [shape: f32[1,128], index: 2, kind: input, shape index: {}]
  %s3 = inlined_call_operand.vmem [shape: bf16[128,4], index: 3, kind: input, shape index: {}]
  %s4 = inlined_call_operand.vmem [shape: f32[1,4], index: 4, kind: input, shape index: {}]
  %s5 = inlined_call_operand.vmem [shape: f32[256,4], index: 5, kind: output, shape index: {}]
  %s6 = sld [smem:[#allocation0]]
  $region53: #{tpu_custom_call.1} parent=0
    _
  %s8 = ssub.s32 1, %s6
  %s9 = scalar_select 0, %s8, %s6
  loop: start=0, step=1, limit=4
  $region2: #{tpu_custom_call.1} parent=0 // loop_pre_header
    _
  $region3: #{tpu_custom_call.1} parent=0 // loop_header
    %s11 = sphi 0, %s15
    %p12 = scmp.ge.s32.totalorder %s11, 4
    %s21 = sphi 0, %s23
    %s24 = sphi 0, %s21
    %s25 = sphi 0, %s24
    %s41 = sphi 0, %s25
    %s45 = sphi 0, %s45
    %s47 = sphi 0, %s45
    %s48 = sphi 0, %s47
    %s62 = sphi 0, %s48
    %s66 = sphi 0, %s66
    %s68 = sphi 0, %s66
    %s69 = sphi 0, %s68
    %s83 = sphi 0, %s69
    %s87 = sphi 0, %s87
    %s89 = sphi 0, %s87
    %s90 = sphi 0, %s89
    %s104 = sphi 0, %s90
    %s108 = sphi 0, %s108
    %s110 = sphi 0, %s108
    %s111 = sphi 0, %s110
    %s125 = sphi 0, %s111
    %s131 = sphi 0, %s133
    %s134 = sphi 0, %s131
    %s135 = sphi 0, %s134
    %s151 = sphi 0, %s135
  $region4: #{tpu_custom_call.1} parent=0 // loop_header_branch
    %14 = sbr.rel (%p12) target = $region8
  $region5: #{tpu_custom_call.1} parent=0 // loop_body
    %s16 = ssub.s32 %s11, 1
    %s17 = ssub.s32 %s11, 2
    %s18 = sadd.s32 %s11, 1
    %s19 = ssub.s32 %s11, %s18
    %p20 = scmp.eq.s32.totalorder %s19, 0
    %s22 = sadd.s32 %s21, 1
    %s23 = scalar_select %p20, %s21, %s22
    %p26 = pneg %p20
    %p27 = scmp.eq.s32.totalorder %s11, 1
    %p28 = por %p26, %p27
    %p29 = scmp.ne.s32.totalorder %s21, %s24
    %p30 = scmp.eq.s32.totalorder %s11, 0
    %p31 = por %p29, %p30
    %p32 = scmp.ne.s32.totalorder %s21, %s24
    %p33 = scmp.eq.s32.totalorder %s16, 1
    %p34 = por %p32, %p33
    %p35 = scmp.ne.s32.totalorder %s24, %s25
    %p36 = scmp.eq.s32.totalorder %s16, 0
    %p37 = por %p35, %p36
    %p38 = scmp.ne.s32.totalorder %s24, %s25
    %p39 = scmp.eq.s32.totalorder %s17, 1
    %p40 = por %p38, %p39
    %p42 = scmp.ne.s32.totalorder %s25, %s41
    %p43 = scmp.eq.s32.totalorder %s17, 0
    %p44 = por %p42, %p43
    %s46 = sadd.s32 %s45, 1
    %p49 = scmp.eq.s32.totalorder %s11, 1
    %p50 = scmp.ne.s32.totalorder %s45, %s47
    %p51 = scmp.eq.s32.totalorder %s11, 0
    %p52 = por %p50, %p51
    %p53 = scmp.ne.s32.totalorder %s45, %s47
    %p54 = scmp.eq.s32.totalorder %s16, 1
    %p55 = por %p53, %p54
    %p56 = scmp.ne.s32.totalorder %s47, %s48
    %p57 = scmp.eq.s32.totalorder %s16, 0
    %p58 = por %p56, %p57
    %p59 = scmp.ne.s32.totalorder %s47, %s48
    %p60 = scmp.eq.s32.totalorder %s17, 1
    %p61 = por %p59, %p60
    %p63 = scmp.ne.s32.totalorder %s48, %s62
    %p64 = scmp.eq.s32.totalorder %s17, 0
    %p65 = por %p63, %p64
    %s67 = sadd.s32 %s66, 1
    %p70 = scmp.eq.s32.totalorder %s11, 1
    %p71 = scmp.ne.s32.totalorder %s66, %s68
    %p72 = scmp.eq.s32.totalorder %s11, 0
    %p73 = por %p71, %p72
    %p74 = scmp.ne.s32.totalorder %s66, %s68
    %p75 = scmp.eq.s32.totalorder %s16, 1
    %p76 = por %p74, %p75
    %p77 = scmp.ne.s32.totalorder %s68, %s69
    %p78 = scmp.eq.s32.totalorder %s16, 0
    %p79 = por %p77, %p78
    %p80 = scmp.ne.s32.totalorder %s68, %s69
    %p81 = scmp.eq.s32.totalorder %s17, 1
    %p82 = por %p80, %p81
    %p84 = scmp.ne.s32.totalorder %s69, %s83
    %p85 = scmp.eq.s32.totalorder %s17, 0
    %p86 = por %p84, %p85
    %s88 = sadd.s32 %s87, 1
    %p91 = scmp.eq.s32.totalorder %s11, 1
    %p92 = scmp.ne.s32.totalorder %s87, %s89
    %p93 = scmp.eq.s32.totalorder %s11, 0
    %p94 = por %p92, %p93
    %p95 = scmp.ne.s32.totalorder %s87, %s89
    %p96 = scmp.eq.s32.totalorder %s16, 1
    %p97 = por %p95, %p96
    %p98 = scmp.ne.s32.totalorder %s89, %s90
    %p99 = scmp.eq.s32.totalorder %s16, 0
    %p100 = por %p98, %p99
    %p101 = scmp.ne.s32.totalorder %s89, %s90
    %p102 = scmp.eq.s32.totalorder %s17, 1
    %p103 = por %p101, %p102
    %p105 = scmp.ne.s32.totalorder %s90, %s104
    %p106 = scmp.eq.s32.totalorder %s17, 0
    %p107 = por %p105, %p106
    %s109 = sadd.s32 %s108, 1
    %p112 = scmp.eq.s32.totalorder %s11, 1
    %p113 = scmp.ne.s32.totalorder %s108, %s110
    %p114 = scmp.eq.s32.totalorder %s11, 0
    %p115 = por %p113, %p114
    %p116 = scmp.ne.s32.totalorder %s108, %s110
    %p117 = scmp.eq.s32.totalorder %s16, 1
    %p118 = por %p116, %p117
    %p119 = scmp.ne.s32.totalorder %s110, %s111
    %p120 = scmp.eq.s32.totalorder %s16, 0
    %p121 = por %p119, %p120
    %p122 = scmp.ne.s32.totalorder %s110, %s111
    %p123 = scmp.eq.s32.totalorder %s17, 1
    %p124 = por %p122, %p123
    %p126 = scmp.ne.s32.totalorder %s111, %s125
    %p127 = scmp.eq.s32.totalorder %s17, 0
    %p128 = por %p126, %p127
    %s129 = ssub.s32 %s11, %s18
    %p130 = scmp.eq.s32.totalorder %s129, 0
    %s132 = sadd.s32 %s131, 1
    %s133 = scalar_select %p130, %s131, %s132
    %p136 = pneg %p130
    %p137 = scmp.eq.s32.totalorder %s11, 1
    %p138 = por %p136, %p137
    %p139 = scmp.ne.s32.totalorder %s131, %s134
    %p140 = scmp.eq.s32.totalorder %s11, 0
    %p141 = por %p139, %p140
    %p142 = scmp.ne.s32.totalorder %s131, %s134
    %p143 = scmp.eq.s32.totalorder %s16, 1
    %p144 = por %p142, %p143
    %p145 = scmp.ne.s32.totalorder %s134, %s135
    %p146 = scmp.eq.s32.totalorder %s16, 0
    %p147 = por %p145, %p146
    %p148 = scmp.ne.s32.totalorder %s134, %s135
    %p149 = scmp.eq.s32.totalorder %s17, 1
    %p150 = por %p148, %p149
    %p152 = scmp.ne.s32.totalorder %s135, %s151
    %p153 = scmp.eq.s32.totalorder %s17, 0
    %p154 = por %p152, %p153
    %p155 = scmp.le.s32.totalorder 1, %s11
    %p156 = scmp.lt.s32.totalorder %s11, 3
    %p157 = pnand %p155, %p156
    %p158 = pneg %p157
    // Predicated region
    $region9: #{tpu_custom_call.1} parent=5 // pred_check
      _
    $region10: #{tpu_custom_call.1} parent=5 // pred_check_branch
      %160 = sbr.rel (%p157) target = $region12
    $region11: #{tpu_custom_call.1} parent=5 // pred_region
      %s161 = ssub.s32 %s11, 1
      // Predicated region
      $region13: #{tpu_custom_call.1} parent=11 // pred_check
        %p162 = pneg %p58
      $region14: #{tpu_custom_call.1} parent=11 // pred_check_branch
        %164 = sbr.rel (%p162) target = $region16
      $region15: #{tpu_custom_call.1} parent=11 // pred_region
        _
      $region16: #{tpu_custom_call.1} parent=11 // pred_fallthru
        _
      // Predicated region
      $region17: #{tpu_custom_call.1} parent=11 // pred_check
        %p165 = pneg %p79
      $region18: #{tpu_custom_call.1} parent=11 // pred_check_branch
        %167 = sbr.rel (%p165) target = $region20
      $region19: #{tpu_custom_call.1} parent=11 // pred_region
        _
      $region20: #{tpu_custom_call.1} parent=11 // pred_fallthru
        _
      // Predicated region
      $region21: #{tpu_custom_call.1} parent=11 // pred_check
        %p168 = pneg %p100
      $region22: #{tpu_custom_call.1} parent=11 // pred_check_branch
        %170 = sbr.rel (%p168) target = $region24
      $region23: #{tpu_custom_call.1} parent=11 // pred_region
        _
      $region24: #{tpu_custom_call.1} parent=11 // pred_fallthru
        _
      // Predicated region
      $region25: #{tpu_custom_call.1} parent=11 // pred_check
        %p171 = pneg %p121
      $region26: #{tpu_custom_call.1} parent=11 // pred_check_branch
        %173 = sbr.rel (%p171) target = $region28
      $region27: #{tpu_custom_call.1} parent=11 // pred_region
        _
      $region28: #{tpu_custom_call.1} parent=11 // pred_fallthru
        _
    $region12: #{tpu_custom_call.1} parent=5 // pred_fallthru
      _
    %p174 = scmp.lt.s32.totalorder %s11, 2
    // Predicated region
    $region29: #{tpu_custom_call.1} parent=5 // pred_check
      %p175 = pneg %p174
    $region30: #{tpu_custom_call.1} parent=5 // pred_check_branch
      %177 = sbr.rel (%p175) target = $region32
    $region31: #{tpu_custom_call.1} parent=5 // pred_region
      // Predicated region
      $region33: #{tpu_custom_call.1} parent=31 // pred_check
        %p178 = pneg %p31
      $region34: #{tpu_custom_call.1} parent=31 // pred_check_branch
        %180 = sbr.rel (%p178) target = $region36
      $region35: #{tpu_custom_call.1} parent=31 // pred_region
        %s181 = smul.u32 16, %s11
        %p182 = scmp.lt.s32.totalorder %s181, 31
        %s183 = scalar_select %p182, %s181, 31
        %s184 = smul.addr %s183, 8
        %s185 = scalar_lea.vmem %s0, %s184
        %s186 = smul.u32 16, %s11
      $region36: #{tpu_custom_call.1} parent=31 // pred_fallthru
        _
    $region32: #{tpu_custom_call.1} parent=5 // pred_fallthru
      _
    %p187 = scmp.le.s32.totalorder 1, %s11
    %p188 = scmp.lt.s32.totalorder %s11, 3
    %p189 = pnand %p187, %p188
    %p190 = pneg %p189
    // Predicated region
    $region37: #{tpu_custom_call.1} parent=5 // pred_check
      _
    $region38: #{tpu_custom_call.1} parent=5 // pred_check_branch
      %192 = sbr.rel (%p189) target = $region40
    $region39: #{tpu_custom_call.1} parent=5 // pred_region
      %s193 = ssub.s32 %s11, 1
      %s194 = smul.u32 16, %s16
      %p195 = scmp.lt.s32.totalorder %s194, 31
      %s196 = scalar_select %p195, %s194, 31
      %s197 = smul.addr %s196, 8
      %s198 = scalar_lea.vmem %s0, %s197
      %p199 = pneg %p37
      %p200 = pneg %p34
      %p201 = pneg %p58
      %p202 = pneg %p55
      %p203 = pneg %p79
      %p204 = pneg %p76
      %p205 = pneg %p100
      %p206 = pneg %p97
      %p207 = pneg %p121
      %p208 = pneg %p118
      %p209 = pneg %p147
      %p210 = pneg %p144
      %s211 = smul.u32 16, %s16
      %p212 = scmp.lt.s32.totalorder %s211, 31
      %s213 = scalar_select %p212, %s211, 31
      %s214 = smul.addr %s213, 8
      %s215 = scalar_lea.vmem %s5, %s214
      %s216 = smul.u32 16, %s16
      %p217 = scmp.lt.s32.totalorder %s216, 31
      %s218 = scalar_select %p217, %s216, 31
      %s219 = smul.addr %s218, 8
      %s220 = scalar_lea.vmem %s0, %s219
      %s221 = smul.u32 16, %s16
      %s222 = smul.u32 16, %s16
      %p223 = scmp.lt.s32.totalorder %s222, 31
      %s224 = scalar_select %p223, %s222, 31
      %s225 = smul.addr %s224, 8
      %s226 = scalar_lea.vmem %s5, %s225
      %s227 = smul.u32 16, %s16
      %v229 = vld [vmem:[%s220] sm:$0xff]
      %v230 = vld [vmem:[%s220 + $0x8] sm:$0xff]
      %v231 = vld [vmem:[%s220 + $0x10] sm:$0xff]
      %v232 = vld [vmem:[%s220 + $0x18] sm:$0xff]
      %v233 = vld [vmem:[%s220 + $0x20] sm:$0xff]
      %v234 = vld [vmem:[%s220 + $0x28] sm:$0xff]
      %v235 = vld [vmem:[%s220 + $0x30] sm:$0xff]
      %v236 = vld [vmem:[%s220 + $0x38] sm:$0xff]
      %v237 = vld [vmem:[%s220 + $0x40] sm:$0xff]
      %v238 = vld [vmem:[%s220 + $0x48] sm:$0xff]
      %v239 = vld [vmem:[%s220 + $0x50] sm:$0xff]
      %v240 = vld [vmem:[%s220 + $0x58] sm:$0xff]
      %v241 = vld [vmem:[%s220 + $0x60] sm:$0xff]
      %v242 = vld [vmem:[%s220 + $0x68] sm:$0xff]
      %v243 = vld [vmem:[%s220 + $0x70] sm:$0xff]
      %v244 = vld [vmem:[%s220 + $0x78] sm:$0xff]
      %v245 = vpack.c.bf16 %v230, %v229
      %v246 = vpack.c.bf16 %v232, %v231
      %v247 = vpack.c.bf16 %v234, %v233
      %v248 = vpack.c.bf16 %v236, %v235
      %v249 = vpack.c.bf16 %v238, %v237
      %v250 = vpack.c.bf16 %v240, %v239
      %v251 = vpack.c.bf16 %v242, %v241
      %v252 = vpack.c.bf16 %v244, %v243
      %v253 = vld [vmem:[%s1] sm:$0xf]
      %v254 = vld [vmem:[%s1 + $0x4] sm:$0xf]
      %v255 = vld [vmem:[%s2] sm:$0x1]
      %v257 = vlaneseq
      %v258 = vshrl.u32 %v257, 7
      %v259 = vsub.s32 0, %v258
      %v260 = vrot.slane %v255, %v259
      %v264 = vunpack.c.l.b16 %v253
      %v265 = vunpack.c.l.b16 %v254
      %v266 = vpack.c.b16 %v265, %v264
      %vm268 = vcmask 130048
      %v270 = vsel %vm268, %v245, 0
      %v273 = vsel %vm268, %v246, 0
      %v276 = vsel %vm268, %v247, 0
      %v279 = vsel %vm268, %v248, 0
      %v282 = vsel %vm268, %v249, 0
      %v285 = vsel %vm268, %v250, 0
      %v288 = vsel %vm268, %v251, 0
      %v291 = vsel %vm268, %v252, 0
      %293 = vmatprep.subr.bf16.mxu0 0
      %294 = vmatpush1.bf16.msra.mxu0 %v266
      %295 = vmatprep.subr.bf16.mxu0 0
      %296 = vmatpush1.bf16.msra.mxu0 0
      %297 = vmatprep.subr.bf16.mxu0 0
      %298 = vmatpush1.bf16.msra.mxu0 0
      %299 = vmatprep.subr.bf16.mxu0 0
      %300 = vmatpush1.bf16.msra.mxu0 0
      %301 = vmatprep.subr.bf16.mxu0 0
      %302 = vmatpush1.bf16.msra.mxu0 0
      %303 = vmatprep.subr.bf16.mxu0 0
      %304 = vmatpush1.bf16.msra.mxu0 0
      %305 = vmatprep.subr.bf16.mxu0 0
      %306 = vmatpush1.bf16.msra.mxu0 0
      %307 = vmatprep.subr.bf16.mxu0 0
      %308 = vmatpush1.bf16.msra.mxu0 0
      %309 = vmatprep.subr.bf16.mxu0 0
      %310 = vmatpush1.bf16.msra.mxu0 0
      %311 = vmatprep.subr.bf16.mxu0 0
      %312 = vmatpush1.bf16.msra.mxu0 0
      %313 = vmatprep.subr.bf16.mxu0 0
      %314 = vmatpush1.bf16.msra.mxu0 0
      %315 = vmatprep.subr.bf16.mxu0 0
      %316 = vmatpush1.bf16.msra.mxu0 0
      %317 = vmatprep.subr.bf16.mxu0 0
      %318 = vmatpush1.bf16.msra.mxu0 0
      %319 = vmatprep.subr.bf16.mxu0 0
      %320 = vmatpush1.bf16.msra.mxu0 0
      %321 = vmatprep.subr.bf16.mxu0 0
      %322 = vmatpush1.bf16.msra.mxu0 0
      %323 = vmatprep.subr.bf16.mxu0 0
      %324 = vmatpush1.bf16.msra.mxu0 0
      %325 = vmatprep.mubr.bf16.mxu0 0
      %326 = vmatmul.mubr.bf16.gmra.mrb[0].mxu0 %v270
      %v327 = vpop.f32.mrb[0].mxu0
      %v328 = vadd.f32 %v260, %v327
      %v329 = vpop.f32.mrb[0].mxu0
      %v330 = vpop.f32.mrb[0].mxu0
      %v331 = vadd.f32 %v260, %v330
      %v332 = vpop.f32.mrb[0].mxu0
      %333 = vmatprep.mubr.bf16.mxu0 0
      %334 = vmatmul.mubr.bf16.gmra.mrb[0].mxu0 %v273
      %v335 = vpop.f32.mrb[0].mxu0
      %v336 = vadd.f32 %v260, %v335
      %v337 = vpop.f32.mrb[0].mxu0
      %v338 = vpop.f32.mrb[0].mxu0
      %v339 = vadd.f32 %v260, %v338
      %v340 = vpop.f32.mrb[0].mxu0
      %341 = vmatprep.mubr.bf16.mxu0 0
      %342 = vmatmul.mubr.bf16.gmra.mrb[0].mxu0 %v276
      %v343 = vpop.f32.mrb[0].mxu0
      %v344 = vadd.f32 %v260, %v343
      %v345 = vpop.f32.mrb[0].mxu0
      %v346 = vpop.f32.mrb[0].mxu0
      %v347 = vadd.f32 %v260, %v346
      %v348 = vpop.f32.mrb[0].mxu0
      %349 = vmatprep.mubr.bf16.mxu0 0
      %350 = vmatmul.mubr.bf16.gmra.mrb[0].mxu0 %v279
      %v351 = vpop.f32.mrb[0].mxu0
      %v352 = vadd.f32 %v260, %v351
      %v353 = vpop.f32.mrb[0].mxu0
      %v354 = vpop.f32.mrb[0].mxu0
      %v355 = vadd.f32 %v260, %v354
      %v356 = vpop.f32.mrb[0].mxu0
      %357 = vmatprep.mubr.bf16.mxu0 0
      %358 = vmatmul.mubr.bf16.gmra.mrb[0].mxu0 %v282
      %v359 = vpop.f32.mrb[0].mxu0
      %v360 = vadd.f32 %v260, %v359
      %v361 = vpop.f32.mrb[0].mxu0
      %v362 = vpop.f32.mrb[0].mxu0
      %v363 = vadd.f32 %v260, %v362
      %v364 = vpop.f32.mrb[0].mxu0
      %365 = vmatprep.mubr.bf16.mxu0 0
      %366 = vmatmul.mubr.bf16.gmra.mrb[0].mxu0 %v285
      %v367 = vpop.f32.mrb[0].mxu0
      %v368 = vadd.f32 %v260, %v367
      %v369 = vpop.f32.mrb[0].mxu0
      %v370 = vpop.f32.mrb[0].mxu0
      %v371 = vadd.f32 %v260, %v370
      %v372 = vpop.f32.mrb[0].mxu0
      %373 = vmatprep.mubr.bf16.mxu0 0
      %374 = vmatmul.mubr.bf16.gmra.mrb[0].mxu0 %v288
      %v375 = vpop.f32.mrb[0].mxu0
      %v376 = vadd.f32 %v260, %v375
      %v377 = vpop.f32.mrb[0].mxu0
      %v378 = vpop.f32.mrb[0].mxu0
      %v379 = vadd.f32 %v260, %v378
      %v380 = vpop.f32.mrb[0].mxu0
      %381 = vmatprep.mubr.bf16.mxu0 0
      %382 = vmatmul.mubr.bf16.gmra.mrb[0].mxu0 %v291
      %v383 = vpop.f32.mrb[0].mxu0
      %v384 = vadd.f32 %v260, %v383
      %v385 = vpop.f32.mrb[0].mxu0
      %v386 = vpop.f32.mrb[0].mxu0
      %v387 = vadd.f32 %v260, %v386
      %v388 = vpop.f32.mrb[0].mxu0
      %389 = vdwg.mxu0
      %v390 = vtanh.pop %v328
      %v391 = vtanh.pop %v331
      %v392 = vtanh.pop %v336
      %v393 = vtanh.pop %v339
      %v394 = vtanh.pop %v344
      %v395 = vtanh.pop %v347
      %v396 = vtanh.pop %v352
      %v397 = vtanh.pop %v355
      %v398 = vtanh.pop %v360
      %v399 = vtanh.pop %v363
      %v400 = vtanh.pop %v368
      %v401 = vtanh.pop %v371
      %v402 = vtanh.pop %v376
      %v403 = vtanh.pop %v379
      %v404 = vtanh.pop %v384
      %v405 = vtanh.pop %v387
      %v406 = vpack.c.bf16 %v391, %v390
      %v407 = vpack.c.bf16 %v393, %v392
      %v408 = vpack.c.bf16 %v395, %v394
      %v409 = vpack.c.bf16 %v397, %v396
      %v410 = vpack.c.bf16 %v399, %v398
      %v411 = vpack.c.bf16 %v401, %v400
      %v412 = vpack.c.bf16 %v403, %v402
      %v413 = vpack.c.bf16 %v405, %v404
      %v414 = vld [vmem:[%s3] sm:$0xf]
      %v415 = vld [vmem:[%s3 + $0x4] sm:$0xf]
      %v416 = vld [vmem:[%s3 + $0x8] sm:$0xf]
      %v417 = vld [vmem:[%s3 + $0xc] sm:$0xf]
      %v418 = vld [vmem:[%s3 + $0x10] sm:$0xf]
      %v419 = vld [vmem:[%s3 + $0x14] sm:$0xf]
      %v420 = vld [vmem:[%s3 + $0x18] sm:$0xf]
      %v421 = vld [vmem:[%s3 + $0x1c] sm:$0xf]
      %v422 = vld [vmem:[%s3 + $0x20] sm:$0xf]
      %v423 = vld [vmem:[%s3 + $0x24] sm:$0xf]
      %v424 = vld [vmem:[%s3 + $0x28] sm:$0xf]
      %v425 = vld [vmem:[%s3 + $0x2c] sm:$0xf]
      %v426 = vld [vmem:[%s3 + $0x30] sm:$0xf]
      %v427 = vld [vmem:[%s3 + $0x34] sm:$0xf]
      %v428 = vld [vmem:[%s3 + $0x38] sm:$0xf]
      %v429 = vld [vmem:[%s3 + $0x3c] sm:$0xf]
      %v430 = vld [vmem:[%s4] sm:$0x1]
      %v432 = vlaneseq
      %v433 = vshrl.u32 %v432, 7
      %v434 = vsub.s32 0, %v433
      %v435 = vrot.slane %v430, %v434
      %v453 = vunpack.c.l.b16 %v414
      %v454 = vunpack.c.l.b16 %v415
      %v455 = vunpack.c.l.b16 %v416
      %v456 = vunpack.c.l.b16 %v417
      %v457 = vunpack.c.l.b16 %v418
      %v458 = vunpack.c.l.b16 %v419
      %v459 = vunpack.c.l.b16 %v420
      %v460 = vunpack.c.l.b16 %v421
      %v461 = vunpack.c.l.b16 %v422
      %v462 = vunpack.c.l.b16 %v423
      %v463 = vunpack.c.l.b16 %v424
      %v464 = vunpack.c.l.b16 %v425
      %v465 = vunpack.c.l.b16 %v426
      %v466 = vunpack.c.l.b16 %v427
      %v467 = vunpack.c.l.b16 %v428
      %v468 = vunpack.c.l.b16 %v429
      %v469 = vpack.c.b16 %v454, %v453
      %v470 = vpack.c.b16 %v456, %v455
      %v471 = vpack.c.b16 %v458, %v457
      %v472 = vpack.c.b16 %v460, %v459
      %v473 = vpack.c.b16 %v462, %v461
      %v474 = vpack.c.b16 %v464, %v463
      %v475 = vpack.c.b16 %v466, %v465
      %v476 = vpack.c.b16 %v468, %v467
      %485 = vmatprep.subr.bf16.mxu0 0
      %486 = vmatpush1.bf16.msra.mxu0 %v469
      %487 = vmatprep.subr.bf16.mxu0 0
      %488 = vmatpush1.bf16.msra.mxu0 %v470
      %489 = vmatprep.subr.bf16.mxu0 0
      %490 = vmatpush1.bf16.msra.mxu0 %v471
      %491 = vmatprep.subr.bf16.mxu0 0
      %492 = vmatpush1.bf16.msra.mxu0 %v472
      %493 = vmatprep.subr.bf16.mxu0 0
      %494 = vmatpush1.bf16.msra.mxu0 %v473
      %495 = vmatprep.subr.bf16.mxu0 0
      %496 = vmatpush1.bf16.msra.mxu0 %v474
      %497 = vmatprep.subr.bf16.mxu0 0
      %498 = vmatpush1.bf16.msra.mxu0 %v475
      %499 = vmatprep.subr.bf16.mxu0 0
      %500 = vmatpush1.bf16.msra.mxu0 %v476
      %501 = vmatprep.subr.bf16.mxu0 0
      %502 = vmatpush1.bf16.msra.mxu0 0
      %503 = vmatprep.subr.bf16.mxu0 0
      %504 = vmatpush1.bf16.msra.mxu0 0
      %505 = vmatprep.subr.bf16.mxu0 0
      %506 = vmatpush1.bf16.msra.mxu0 0
      %507 = vmatprep.subr.bf16.mxu0 0
      %508 = vmatpush1.bf16.msra.mxu0 0
      %509 = vmatprep.subr.bf16.mxu0 0
      %510 = vmatpush1.bf16.msra.mxu0 0
      %511 = vmatprep.subr.bf16.mxu0 0
      %512 = vmatpush1.bf16.msra.mxu0 0
      %513 = vmatprep.subr.bf16.mxu0 0
      %514 = vmatpush1.bf16.msra.mxu0 0
      %515 = vmatprep.subr.bf16.mxu0 0
      %516 = vmatpush1.bf16.msra.mxu0 0
      %517 = vmatprep.mubr.bf16.mxu0 0
      %518 = vmatmul.mubr.bf16.gmra.mrb[0].mxu0 %v406
      %v519 = vpop.f32.mrb[0].mxu0
      %v520 = vadd.f32 %v435, %v519
      %v521 = vpop.f32.mrb[0].mxu0
      %v522 = vpop.f32.mrb[0].mxu0
      %v523 = vadd.f32 %v435, %v522
      %v524 = vpop.f32.mrb[0].mxu0
      %525 = vmatprep.mubr.bf16.mxu0 0
      %526 = vmatmul.mubr.bf16.gmra.mrb[0].mxu0 %v407
      %v527 = vpop.f32.mrb[0].mxu0
      %v528 = vadd.f32 %v435, %v527
      %v529 = vpop.f32.mrb[0].mxu0
      %v530 = vpop.f32.mrb[0].mxu0
      %v531 = vadd.f32 %v435, %v530
      %v532 = vpop.f32.mrb[0].mxu0
      %533 = vmatprep.mubr.bf16.mxu0 0
      %534 = vmatmul.mubr.bf16.gmra.mrb[0].mxu0 %v408
      %v535 = vpop.f32.mrb[0].mxu0
      %v536 = vadd.f32 %v435, %v535
      %v537 = vpop.f32.mrb[0].mxu0
      %v538 = vpop.f32.mrb[0].mxu0
      %v539 = vadd.f32 %v435, %v538
      %v540 = vpop.f32.mrb[0].mxu0
      %541 = vmatprep.mubr.bf16.mxu0 0
      %542 = vmatmul.mubr.bf16.gmra.mrb[0].mxu0 %v409
      %v543 = vpop.f32.mrb[0].mxu0
      %v544 = vadd.f32 %v435, %v543
      %v545 = vpop.f32.mrb[0].mxu0
      %v546 = vpop.f32.mrb[0].mxu0
      %v547 = vadd.f32 %v435, %v546
      %v548 = vpop.f32.mrb[0].mxu0
      %549 = vmatprep.mubr.bf16.mxu0 0
      %550 = vmatmul.mubr.bf16.gmra.mrb[0].mxu0 %v410
      %v551 = vpop.f32.mrb[0].mxu0
      %v552 = vadd.f32 %v435, %v551
      %v553 = vpop.f32.mrb[0].mxu0
      %v554 = vpop.f32.mrb[0].mxu0
      %v555 = vadd.f32 %v435, %v554
      %v556 = vpop.f32.mrb[0].mxu0
      %557 = vmatprep.mubr.bf16.mxu0 0
      %558 = vmatmul.mubr.bf16.gmra.mrb[0].mxu0 %v411
      %v559 = vpop.f32.mrb[0].mxu0
      %v560 = vadd.f32 %v435, %v559
      %v561 = vpop.f32.mrb[0].mxu0
      %v562 = vpop.f32.mrb[0].mxu0
      %v563 = vadd.f32 %v435, %v562
      %v564 = vpop.f32.mrb[0].mxu0
      %565 = vmatprep.mubr.bf16.mxu0 0
      %566 = vmatmul.mubr.bf16.gmra.mrb[0].mxu0 %v412
      %v567 = vpop.f32.mrb[0].mxu0
      %v568 = vadd.f32 %v435, %v567
      %v569 = vpop.f32.mrb[0].mxu0
      %v570 = vpop.f32.mrb[0].mxu0
      %v571 = vadd.f32 %v435, %v570
      %v572 = vpop.f32.mrb[0].mxu0
      %573 = vmatprep.mubr.bf16.mxu0 0
      %574 = vmatmul.mubr.bf16.gmra.mrb[0].mxu0 %v413
      %v575 = vpop.f32.mrb[0].mxu0
      %v576 = vadd.f32 %v435, %v575
      %v577 = vpop.f32.mrb[0].mxu0
      %v578 = vpop.f32.mrb[0].mxu0
      %v579 = vadd.f32 %v435, %v578
      %v580 = vpop.f32.mrb[0].mxu0
      %581 = vdwg.mxu0
      %v582 = vtanh.pop %v520
      %v583 = vtanh.pop %v523
      %v584 = vtanh.pop %v528
      %v585 = vtanh.pop %v531
      %v586 = vtanh.pop %v536
      %v587 = vtanh.pop %v539
      %v588 = vtanh.pop %v544
      %v589 = vtanh.pop %v547
      %v590 = vtanh.pop %v552
      %v591 = vtanh.pop %v555
      %v592 = vtanh.pop %v560
      %v593 = vtanh.pop %v563
      %v594 = vtanh.pop %v568
      %v595 = vtanh.pop %v571
      %v596 = vtanh.pop %v576
      %v597 = vtanh.pop %v579
      %vm598 = vcmask 31744
      %599 = vst.msk [vmem:[%s226] sm:$0xff] %vm598, %v582
      %600 = vst.msk [vmem:[%s226 + $0x8] sm:$0xff] %vm598, %v583
      %601 = vst.msk [vmem:[%s226 + $0x10] sm:$0xff] %vm598, %v584
      %602 = vst.msk [vmem:[%s226 + $0x18] sm:$0xff] %vm598, %v585
      %603 = vst.msk [vmem:[%s226 + $0x20] sm:$0xff] %vm598, %v586
      %604 = vst.msk [vmem:[%s226 + $0x28] sm:$0xff] %vm598, %v587
      %605 = vst.msk [vmem:[%s226 + $0x30] sm:$0xff] %vm598, %v588
      %606 = vst.msk [vmem:[%s226 + $0x38] sm:$0xff] %vm598, %v589
      %607 = vst.msk [vmem:[%s226 + $0x40] sm:$0xff] %vm598, %v590
      %608 = vst.msk [vmem:[%s226 + $0x48] sm:$0xff] %vm598, %v591
      %609 = vst.msk [vmem:[%s226 + $0x50] sm:$0xff] %vm598, %v592
      %610 = vst.msk [vmem:[%s226 + $0x58] sm:$0xff] %vm598, %v593
      %611 = vst.msk [vmem:[%s226 + $0x60] sm:$0xff] %vm598, %v594
      %612 = vst.msk [vmem:[%s226 + $0x68] sm:$0xff] %vm598, %v595
      %613 = vst.msk [vmem:[%s226 + $0x70] sm:$0xff] %vm598, %v596
      %614 = vst.msk [vmem:[%s226 + $0x78] sm:$0xff] %vm598, %v597
      %s615 = smul.u32 16, %s16
      %p616 = scmp.lt.s32.totalorder %s615, 31
      %s617 = scalar_select %p616, %s615, 31
      %s618 = smul.addr %s617, 8
      %s619 = scalar_lea.vmem %s5, %s618
      // Predicated region
      $region41: #{tpu_custom_call.1} parent=39 // pred_check
        %p620 = pneg %p144
      $region42: #{tpu_custom_call.1} parent=39 // pred_check_branch
        %622 = sbr.rel (%p620) target = $region44
      $region43: #{tpu_custom_call.1} parent=39 // pred_region
        %s623 = smul.u32 16, %s16
      $region44: #{tpu_custom_call.1} parent=39 // pred_fallthru
        _
    $region40: #{tpu_custom_call.1} parent=5 // pred_fallthru
      _
    %p624 = scmp.le.s32.totalorder 2, %s11
    // Predicated region
    $region45: #{tpu_custom_call.1} parent=5 // pred_check
      %p625 = pneg %p624
    $region46: #{tpu_custom_call.1} parent=5 // pred_check_branch
      %627 = sbr.rel (%p625) target = $region48
    $region47: #{tpu_custom_call.1} parent=5 // pred_region
      %s628 = ssub.s32 %s11, 2
      // Predicated region
      $region49: #{tpu_custom_call.1} parent=47 // pred_check
        %p629 = pneg %p150
      $region50: #{tpu_custom_call.1} parent=47 // pred_check_branch
        %631 = sbr.rel (%p629) target = $region52
      $region51: #{tpu_custom_call.1} parent=47 // pred_region
        %s632 = smul.u32 16, %s17
        %p633 = scmp.lt.s32.totalorder %s632, 31
        %s634 = scalar_select %p633, %s632, 31
        %s635 = smul.addr %s634, 8
        %s636 = scalar_lea.vmem %s5, %s635
      $region52: #{tpu_custom_call.1} parent=47 // pred_fallthru
        _
    $region48: #{tpu_custom_call.1} parent=5 // pred_fallthru
      _
  $region6: #{tpu_custom_call.1} parent=0 // loop_footer
    %s15 = sadd.s32 1, %s11
  $region7: #{tpu_custom_call.1} parent=0 // loop_footer_branch
    %10 = sbr.rel target = $region3
  $region8: #{tpu_custom_call.1} parent=0 // loop_exit
    _

</llo_original>
